<compile_context>
chip_gen: v6e
topology: v6e:2x2x1
jax: 0.10.0
libtpu: 0.0.40
codegen_flags: <defaults>
</compile_context>

<pallas_src>
import functools

import jax
import jax.numpy as jnp
from jax.experimental import pallas as pl
from jax.experimental.pallas import tpu as pltpu


def _round_up(x, m):
    return ((x + m - 1) // m) * m


def _lstm_rollout_kernel(x_ref, hc0_ref, w_ih0_ref, w_ihr_ref, w_hh_ref, b_ref,
                         out_ref, hc_ref, *, hidden, num_layers):
    """One timestep (all layers) per grid iteration; state carried in hc_ref.

    x_ref:     (1, B, NI_pad)        current timestep input (f32)
    hc0_ref:   (L, B, 2H)            initial [h | c] state (f32), read at t==0
    w_ih0_ref: (NI_pad, 4H)          layer-0 W_ih^T (bf16, zero-padded rows)
    w_ihr_ref: (max(L-1,1), H, 4H)   W_ih^T for layers >= 1 (bf16)
    w_hh_ref:  (L, H, 4H)            W_hh^T (bf16)
    b_ref:     (L, 1, 4H)            b_ih + b_hh (f32)
    out_ref:   (1, B, H)             top-layer hidden for this timestep
    hc_ref:    (L, B, 2H)            resident output block = carried state
    """
    H = hidden

    @pl.when(pl.program_id(0) == 0)
    def _init_state():
        hc_ref[...] = hc0_ref[...]

    layer_in = x_ref[0]                                   # (B, NI_pad) f32
    h_new = None
    for layer in range(num_layers):                       # tiny static unroll
        w_in = w_ih0_ref[...] if layer == 0 else w_ihr_ref[layer - 1]
        hc_l = hc_ref[layer]                              # (B, 2H) f32
        h_l = hc_l[:, 0:H]
        c_l = hc_l[:, H:2 * H]

        # Two small MXU dots (f32 accumulation); no VMEM concat round-trip.
        gates = (jnp.dot(layer_in.astype(jnp.bfloat16), w_in,
                         preferred_element_type=jnp.float32)
                 + jnp.dot(h_l.astype(jnp.bfloat16), w_hh_ref[layer],
                           preferred_element_type=jnp.float32)
                 + b_ref[layer])                          # (B, 4H) f32

        # Full 128-lane EUP passes, then slice PyTorch-ordered gates (i,f,g,o).
        sig = jax.nn.sigmoid(gates)
        tnh = jnp.tanh(gates)
        i_g = sig[:, 0 * H:1 * H]
        f_g = sig[:, 1 * H:2 * H]
        o_g = sig[:, 3 * H:4 * H]
        g_g = tnh[:, 2 * H:3 * H]

        c_new = f_g * c_l + i_g * g_g
        h_new = o_g * jnp.tanh(c_new)

        # Single lane-dense store of the packed [h | c] state for this layer.
        hc_ref[layer] = jnp.concatenate([h_new, c_new], axis=-1)
        layer_in = h_new

    out_ref[0] = h_new


@jax.jit
def lstm_controller_rollout(xs, h0, c0, w_ih0_t, w_ihr_t, w_hh_t, b_stack):
    """Run T LSTM-controller timesteps in a single pallas_call.

    xs: (T, B, num_inputs); h0, c0: (L, B, H).
    Returns (out_seq (T,B,H), h_final (L,B,H), c_final (L,B,H)).
    """
    T, B, NI = xs.shape
    L, _, H = h0.shape
    NI_pad = w_ih0_t.shape[0]
    Lr = w_ihr_t.shape[0]

    if NI_pad != NI:                                      # pad x once per rollout
        xs = jnp.pad(xs, ((0, 0), (0, 0), (0, NI_pad - NI)))

    hc0 = jnp.concatenate([h0, c0], axis=-1)              # (L, B, 2H), donated below

    kernel = functools.partial(_lstm_rollout_kernel, hidden=H, num_layers=L)

    out_seq, hc_final = pl.pallas_call(
        kernel,
        grid=(T,),
        in_specs=[
            pl.BlockSpec((1, B, NI_pad), lambda t: (t, 0, 0)),     # x_t
            pl.BlockSpec((L, B, 2 * H), lambda t: (0, 0, 0)),      # hc0 (once)
            pl.BlockSpec((NI_pad, 4 * H), lambda t: (0, 0)),       # W_ih0^T (resident)
            pl.BlockSpec((Lr, H, 4 * H), lambda t: (0, 0, 0)),     # W_ih^T layers>=1
            pl.BlockSpec((L, H, 4 * H), lambda t: (0, 0, 0)),      # W_hh^T (resident)
            pl.BlockSpec((L, 1, 4 * H), lambda t: (0, 0, 0)),      # bias (resident)
        ],
        out_specs=(
            pl.BlockSpec((1, B, H), lambda t: (t, 0, 0)),          # per-step output
            pl.BlockSpec((L, B, 2 * H), lambda t: (0, 0, 0)),      # carried state
        ),
        out_shape=(
            jax.ShapeDtypeStruct((T, B, H), jnp.float32),
            jax.ShapeDtypeStruct((L, B, 2 * H), jnp.float32),
        ),
        input_output_aliases={1: 1},                               # hc0 -> hc_final
        compiler_params=pltpu.CompilerParams(
            dimension_semantics=("arbitrary",)),                   # sequential time
    )(xs, hc0, w_ih0_t, w_ihr_t, w_hh_t, b_stack)

    return out_seq, hc_final[..., :H], hc_final[..., H:]


class LSTMControllerPallas:
    """JAX/Pallas equivalent of the PyTorch LSTMController."""

    def __init__(self, num_inputs, num_outputs, num_layers, key):
        self.num_inputs = num_inputs
        self.num_outputs = num_outputs
        self.num_layers = num_layers

        H = num_outputs
        self.ni_pad = _round_up(num_inputs, 16)            # bf16 sublane packing

        stdev = 5.0 / float((num_inputs + num_outputs) ** 0.5)
        keys = jax.random.split(key, 2 * num_layers + 2)

        # f32 transposed weights kept for the pure-JAX reference.
        self.w_ih_t_f32 = []     # layer 0: (NI,4H); layers>=1: (H,4H)
        self.w_hh_t_f32 = []     # (H,4H)
        for layer in range(num_layers):
            in_dim = num_inputs if layer == 0 else H
            w_ih = jax.random.uniform(keys[2 * layer], (4 * H, in_dim),
                                      minval=-stdev, maxval=stdev, dtype=jnp.float32)
            w_hh = jax.random.uniform(keys[2 * layer + 1], (4 * H, H),
                                      minval=-stdev, maxval=stdev, dtype=jnp.float32)
            self.w_ih_t_f32.append(jnp.transpose(w_ih))
            self.w_hh_t_f32.append(jnp.transpose(w_hh))

        # bf16 weights for the MXU (f32 accumulation inside the kernel).
        w_ih0 = jnp.zeros((self.ni_pad, 4 * H), jnp.float32)
        w_ih0 = w_ih0.at[:num_inputs].set(self.w_ih_t_f32[0])
        self.w_ih0_t = w_ih0.astype(jnp.bfloat16)                       # (NI_pad, 4H)
        if num_layers > 1:
            self.w_ihr_t = jnp.stack(self.w_ih_t_f32[1:]).astype(jnp.bfloat16)
        else:
            self.w_ihr_t = jnp.zeros((1, H, 4 * H), jnp.bfloat16)       # unused dummy
        self.w_hh_t = jnp.stack(self.w_hh_t_f32).astype(jnp.bfloat16)   # (L, H, 4H)

        # b_ih + b_hh, zero-initialized per reset_parameters(); kept f32.
        self.b_stack = jnp.zeros((num_layers, 1, 4 * H), jnp.float32)

        self.lstm_h_bias = 0.05 * jax.random.normal(
            keys[-2], (num_layers, 1, H), dtype=jnp.float32)
        self.lstm_c_bias = 0.05 * jax.random.normal(
            keys[-1], (num_layers, 1, H), dtype=jnp.float32)

    def create_new_state(self, batch_size):
        h = jnp.tile(self.lstm_h_bias, (1, batch_size, 1))
        c = jnp.tile(self.lstm_c_bias, (1, batch_size, 1))
        return (h, c)

    def size(self):
        return (self.num_inputs, self.num_outputs)

    def forward(self, x, prev_state):
        """Module-faithful single timestep: x (B, NI) -> (out, (h, c))."""
        h, c = prev_state
        out_seq, h_new, c_new = lstm_controller_rollout(
            x[None], h, c, self.w_ih0_t, self.w_ihr_t, self.w_hh_t, self.b_stack)
        return out_seq[0], (h_new, c_new)

    def forward_rollout(self, xs, prev_state):
        """Amortized path: xs (T, B, NI) -> (out_seq (T,B,H), (h, c))."""
        h, c = prev_state
        out_seq, h_new, c_new = lstm_controller_rollout(
            xs, h, c, self.w_ih0_t, self.w_ihr_t, self.w_hh_t, self.b_stack)
        return out_seq, (h_new, c_new)


def _reference_rollout(ctrl, xs, h0, c0, *, bf16_matmul):
    """Pure-JAX reference. bf16_matmul=True mimics the kernel's MXU quantization."""
    H, L, T = ctrl.num_outputs, ctrl.num_layers, xs.shape[0]

    def dot(a, w_f32, w_bf16):
        if bf16_matmul:
            return jnp.dot(a.astype(jnp.bfloat16), w_bf16,
                           preferred_element_type=jnp.float32)
        return jnp.dot(a, w_f32)

    h = [h0[l] for l in range(L)]
    c = [c0[l] for l in range(L)]
    outs = []
    for t in range(T):
        inp = xs[t]
        for l in range(L):
            w_ih_b16 = (ctrl.w_ih0_t[:ctrl.num_inputs] if l == 0
                        else ctrl.w_ihr_t[l - 1])
            gates = (dot(inp, ctrl.w_ih_t_f32[l], w_ih_b16)
                     + dot(h[l], ctrl.w_hh_t_f32[l], ctrl.w_hh_t[l])
                     + ctrl.b_stack[l])
            i_g = jax.nn.sigmoid(gates[:, 0:H])
            f_g = jax.nn.sigmoid(gates[:, H:2 * H])
            g_g = jnp.tanh(gates[:, 2 * H:3 * H])
            o_g = jax.nn.sigmoid(gates[:, 3 * H:4 * H])
            c[l] = f_g * c[l] + i_g * g_g
            h[l] = o_g * jnp.tanh(c[l])
            inp = h[l]
        outs.append(inp)
    return jnp.stack(outs), jnp.stack(h), jnp.stack(c)


if __name__ == "__main__":
    # NTM-like sizes: external input 4 + one read head of M=8 -> num_inputs=12.
    batch = 2
    num_inputs = 12
    num_outputs = 32    # controller size
    num_layers = 2
    seq_len = 8         # rollout length for the fused path

    key = jax.random.PRNGKey(0)
    k_params, k_x = jax.random.split(key)

    ctrl = LSTMControllerPallas(num_inputs, num_outputs, num_layers, k_params)
    xs = jax.random.normal(k_x, (seq_len, batch, num_inputs), dtype=jnp.float32)
    h0, c0 = ctrl.create_new_state(batch)

    # Module-faithful single timestep (T=1 through the same fused kernel).
    out1, (h1, c1) = ctrl.forward(xs[0], (h0, c0))
    # Full rollout fused into ONE pallas_call (weights stay VMEM-resident).
    out_seq, (hT, cT) = ctrl.forward_rollout(xs, (h0, c0))
    out1, h1, c1, out_seq, hT, cT = jax.block_until_ready(
        (out1, h1, c1, out_seq, hT, cT))

    assert out1.shape == (batch, num_outputs)
    assert h1.shape == (num_layers, batch, num_outputs)
    assert c1.shape == (num_layers, batch, num_outputs)
    assert out_seq.shape == (seq_len, batch, num_outputs)

    # Tight check vs a reference that applies the same bf16 MXU quantization.
    ref1_o, ref1_h, ref1_c = _reference_rollout(ctrl, xs[:1], h0, c0, bf16_matmul=True)
    refT_o, refT_h, refT_c = _reference_rollout(ctrl, xs, h0, c0, bf16_matmul=True)
    assert jnp.allclose(out1, ref1_o[0], atol=1e-3, rtol=1e-3)
    assert jnp.allclose(h1, ref1_h, atol=1e-3, rtol=1e-3)
    assert jnp.allclose(c1, ref1_c, atol=1e-3, rtol=1e-3)
    assert jnp.allclose(out_seq, refT_o, atol=1e-3, rtol=1e-3)
    assert jnp.allclose(hT, refT_h, atol=1e-3, rtol=1e-3)
    assert jnp.allclose(cT, refT_c, atol=1e-3, rtol=1e-3)

    # Loose check vs pure-f32 (PyTorch-equivalent) math: only bf16 MXU operand
    # quantization separates the two.
    refF_o, refF_h, refF_c = _reference_rollout(ctrl, xs, h0, c0, bf16_matmul=False)
    assert jnp.allclose(out_seq, refF_o, atol=5e-2, rtol=5e-2)
    assert jnp.allclose(hT, refF_h, atol=5e-2, rtol=5e-2)
    assert jnp.allclose(cT, refF_c, atol=5e-2, rtol=5e-2)

    print("KERNEL_OK")
</pallas_src>

<mosaic_0001>
module attributes {stable_mosaic.version = 11 : i64} {
  func.func @_lstm_rollout_kernel(%arg0: i32, %arg1: memref<1x2x16xf32, #tpu.memory_space<vmem>>, %arg2: memref<2x2x64xf32, #tpu.memory_space<vmem>>, %arg3: memref<16x128xbf16, #tpu.memory_space<vmem>>, %arg4: memref<1x32x128xbf16, #tpu.memory_space<vmem>>, %arg5: memref<2x32x128xbf16, #tpu.memory_space<vmem>>, %arg6: memref<2x1x128xf32, #tpu.memory_space<vmem>>, %arg7: memref<1x2x32xf32, #tpu.memory_space<vmem>>, %arg8: memref<2x2x64xf32, #tpu.memory_space<vmem>>) attributes {dimension_semantics = [#tpu.dimension_semantics<arbitrary>], iteration_bounds = array<i64: 1>, scalar_prefetch = 0 : i64, scratch_operands = 0 : i64, tpu.core_type = #tpu.core_type<tc>, window_params = [{transform_indices = @transform_0, window_bounds = array<i64: 1, 2, 16>}, {pipeline_mode = #tpu.pipeline_mode<synchronous>, transform_indices = @transform_1, window_bounds = array<i64: 2, 2, 64>}, {pipeline_mode = #tpu.pipeline_mode<synchronous>, transform_indices = @transform_2, window_bounds = array<i64: 16, 128>}, {pipeline_mode = #tpu.pipeline_mode<synchronous>, transform_indices = @transform_3, window_bounds = array<i64: 1, 32, 128>}, {pipeline_mode = #tpu.pipeline_mode<synchronous>, transform_indices = @transform_4, window_bounds = array<i64: 2, 32, 128>}, {pipeline_mode = #tpu.pipeline_mode<synchronous>, transform_indices = @transform_5, window_bounds = array<i64: 2, 1, 128>}, {transform_indices = @transform_6, window_bounds = array<i64: 1, 2, 32>}, {pipeline_mode = #tpu.pipeline_mode<synchronous>, transform_indices = @transform_7, window_bounds = array<i64: 2, 2, 64>}]} {
    %c0_i32 = arith.constant 0 : i32
    %0 = arith.cmpi eq, %arg0, %c0_i32 : i32
    %1 = arith.extui %0 : i1 to i32
    %c0_i32_0 = arith.constant 0 : i32
    %2 = arith.cmpi ne, %1, %c0_i32_0 : i32
    scf.if %2 {
      %c0_39 = arith.constant 0 : index
      %c0_40 = arith.constant 0 : index
      %c0_41 = arith.constant 0 : index
      %79 = vector.load %arg2[%c0_39, %c0_40, %c0_41] : memref<2x2x64xf32, #tpu.memory_space<vmem>>, vector<2x2x64xf32>
      %c0_42 = arith.constant 0 : index
      %c0_43 = arith.constant 0 : index
      %c0_44 = arith.constant 0 : index
      %80 = vector.load %arg8[%c0_42, %c0_43, %c0_44] : memref<2x2x64xf32, #tpu.memory_space<vmem>>, vector<2x2x64xf32>
      tpu.vector_store %arg8[%c0_42, %c0_43, %c0_44], %79 {strides = array<i32>} : memref<2x2x64xf32, #tpu.memory_space<vmem>>, vector<2x2x64xf32>,
    } else {
    }
    %c0 = arith.constant 0 : index
    %c0_1 = arith.constant 0 : index
    %c0_2 = arith.constant 0 : index
    %3 = vector.load %arg1[%c0, %c0_1, %c0_2] : memref<1x2x16xf32, #tpu.memory_space<vmem>>, vector<1x2x16xf32>
    %4 = vector.shape_cast %3 : vector<1x2x16xf32> to vector<2x16xf32>
    %c0_3 = arith.constant 0 : index
    %c0_4 = arith.constant 0 : index
    %5 = vector.load %arg3[%c0_3, %c0_4] : memref<16x128xbf16, #tpu.memory_space<vmem>>, vector<16x128xbf16>
    %c0_5 = arith.constant 0 : index
    %c0_6 = arith.constant 0 : index
    %c0_7 = arith.constant 0 : index
    %6 = vector.load %arg8[%c0_5, %c0_6, %c0_7] : memref<2x2x64xf32, #tpu.memory_space<vmem>>, vector<1x2x64xf32>
    %7 = vector.shape_cast %6 : vector<1x2x64xf32> to vector<2x64xf32>
    %8 = vector.extract_strided_slice %7 {offsets = [0, 0], sizes = [2, 32], strides = [1, 1]} : vector<2x64xf32> to vector<2x32xf32>
    %9 = vector.extract_strided_slice %7 {offsets = [0, 32], sizes = [2, 32], strides = [1, 1]} : vector<2x64xf32> to vector<2x32xf32>
    %10 = arith.truncf %4 : vector<2x16xf32> to vector<2x16xbf16>
    %cst = arith.constant dense<0.000000e+00> : vector<2x128xf32>
    %11 = tpu.matmul %10, %5, %cst {dimension_numbers = #tpu.dot_dimension_numbers<[1], [0], [0], [1], [0, 0, 1, 1], [], []>} : vector<2x16xbf16>, vector<16x128xbf16>, vector<2x128xf32> -> vector<2x128xf32>
    %12 = arith.truncf %8 : vector<2x32xf32> to vector<2x32xbf16>
    %c0_8 = arith.constant 0 : index
    %c0_9 = arith.constant 0 : index
    %c0_10 = arith.constant 0 : index
    %13 = vector.load %arg5[%c0_8, %c0_9, %c0_10] : memref<2x32x128xbf16, #tpu.memory_space<vmem>>, vector<1x32x128xbf16>
    %14 = vector.shape_cast %13 : vector<1x32x128xbf16> to vector<32x128xbf16>
    %cst_11 = arith.constant dense<0.000000e+00> : vector<2x128xf32>
    %15 = tpu.matmul %12, %14, %cst_11 {dimension_numbers = #tpu.dot_dimension_numbers<[1], [0], [0], [1], [0, 0, 1, 1], [], []>} : vector<2x32xbf16>, vector<32x128xbf16>, vector<2x128xf32> -> vector<2x128xf32>
    %16 = arith.addf %11, %15 : vector<2x128xf32>
    %c0_12 = arith.constant 0 : index
    %c0_13 = arith.constant 0 : index
    %c0_14 = arith.constant 0 : index
    %17 = vector.load %arg6[%c0_12, %c0_13, %c0_14] : memref<2x1x128xf32, #tpu.memory_space<vmem>>, vector<1x1x128xf32>
    %18 = vector.shape_cast %17 : vector<1x1x128xf32> to vector<1x128xf32>
    %19 = vector.broadcast %18 : vector<1x128xf32> to vector<2x128xf32>
    %20 = arith.addf %16, %19 : vector<2x128xf32>
    %21 = arith.negf %20 : vector<2x128xf32>
    %22 = math.exp %21 : vector<2x128xf32>
    %cst_15 = arith.constant 1.000000e+00 : f32
    %23 = vector.broadcast %cst_15 : f32 to vector<2x128xf32>
    %24 = arith.addf %23, %22 : vector<2x128xf32>
    %25 = arith.divf %23, %24 : vector<2x128xf32>
    %26 = math.tanh %20 : vector<2x128xf32>
    %27 = vector.extract_strided_slice %25 {offsets = [0, 0], sizes = [2, 32], strides = [1, 1]} : vector<2x128xf32> to vector<2x32xf32>
    %28 = vector.extract_strided_slice %25 {offsets = [0, 32], sizes = [2, 32], strides = [1, 1]} : vector<2x128xf32> to vector<2x32xf32>
    %29 = vector.extract_strided_slice %25 {offsets = [0, 96], sizes = [2, 32], strides = [1, 1]} : vector<2x128xf32> to vector<2x32xf32>
    %30 = vector.extract_strided_slice %26 {offsets = [0, 64], sizes = [2, 32], strides = [1, 1]} : vector<2x128xf32> to vector<2x32xf32>
    %31 = arith.mulf %28, %9 : vector<2x32xf32>
    %32 = arith.mulf %27, %30 : vector<2x32xf32>
    %33 = arith.addf %31, %32 : vector<2x32xf32>
    %34 = math.tanh %33 : vector<2x32xf32>
    %35 = arith.mulf %29, %34 : vector<2x32xf32>
    %36 = tpu.concatenate %35, %33 in 1 : vector<2x32xf32>, vector<2x32xf32> -> vector<2x64xf32>
    %c0_16 = arith.constant 0 : index
    %c0_17 = arith.constant 0 : index
    %c0_18 = arith.constant 0 : index
    %37 = vector.load %arg8[%c0_16, %c0_17, %c0_18] : memref<2x2x64xf32, #tpu.memory_space<vmem>>, vector<1x2x64xf32>
    %38 = vector.shape_cast %37 : vector<1x2x64xf32> to vector<2x64xf32>
    %39 = vector.shape_cast %36 : vector<2x64xf32> to vector<1x2x64xf32>
    tpu.vector_store %arg8[%c0_16, %c0_17, %c0_18], %39 {strides = array<i32>} : memref<2x2x64xf32, #tpu.memory_space<vmem>>, vector<1x2x64xf32>,
    %c0_19 = arith.constant 0 : index
    %c0_20 = arith.constant 0 : index
    %c0_21 = arith.constant 0 : index
    %40 = vector.load %arg4[%c0_19, %c0_20, %c0_21] : memref<1x32x128xbf16, #tpu.memory_space<vmem>>, vector<1x32x128xbf16>
    %41 = vector.shape_cast %40 : vector<1x32x128xbf16> to vector<32x128xbf16>
    %c1 = arith.constant 1 : index
    %c0_22 = arith.constant 0 : index
    %c0_23 = arith.constant 0 : index
    %42 = vector.load %arg8[%c1, %c0_22, %c0_23] : memref<2x2x64xf32, #tpu.memory_space<vmem>>, vector<1x2x64xf32>
    %43 = vector.shape_cast %42 : vector<1x2x64xf32> to vector<2x64xf32>
    %44 = vector.extract_strided_slice %43 {offsets = [0, 0], sizes = [2, 32], strides = [1, 1]} : vector<2x64xf32> to vector<2x32xf32>
    %45 = vector.extract_strided_slice %43 {offsets = [0, 32], sizes = [2, 32], strides = [1, 1]} : vector<2x64xf32> to vector<2x32xf32>
    %46 = arith.truncf %35 : vector<2x32xf32> to vector<2x32xbf16>
    %cst_24 = arith.constant dense<0.000000e+00> : vector<2x128xf32>
    %47 = tpu.matmul %46, %41, %cst_24 {dimension_numbers = #tpu.dot_dimension_numbers<[1], [0], [0], [1], [0, 0, 1, 1], [], []>} : vector<2x32xbf16>, vector<32x128xbf16>, vector<2x128xf32> -> vector<2x128xf32>
    %48 = arith.truncf %44 : vector<2x32xf32> to vector<2x32xbf16>
    %c1_25 = arith.constant 1 : index
    %c0_26 = arith.constant 0 : index
    %c0_27 = arith.constant 0 : index
    %49 = vector.load %arg5[%c1_25, %c0_26, %c0_27] : memref<2x32x128xbf16, #tpu.memory_space<vmem>>, vector<1x32x128xbf16>
    %50 = vector.shape_cast %49 : vector<1x32x128xbf16> to vector<32x128xbf16>
    %cst_28 = arith.constant dense<0.000000e+00> : vector<2x128xf32>
    %51 = tpu.matmul %48, %50, %cst_28 {dimension_numbers = #tpu.dot_dimension_numbers<[1], [0], [0], [1], [0, 0, 1, 1], [], []>} : vector<2x32xbf16>, vector<32x128xbf16>, vector<2x128xf32> -> vector<2x128xf32>
    %52 = arith.addf %47, %51 : vector<2x128xf32>
    %c1_29 = arith.constant 1 : index
    %c0_30 = arith.constant 0 : index
    %c0_31 = arith.constant 0 : index
    %53 = vector.load %arg6[%c1_29, %c0_30, %c0_31] : memref<2x1x128xf32, #tpu.memory_space<vmem>>, vector<1x1x128xf32>
    %54 = vector.shape_cast %53 : vector<1x1x128xf32> to vector<1x128xf32>
    %55 = vector.broadcast %54 : vector<1x128xf32> to vector<2x128xf32>
    %56 = arith.addf %52, %55 : vector<2x128xf32>
    %57 = arith.negf %56 : vector<2x128xf32>
    %58 = math.exp %57 : vector<2x128xf32>
    %cst_32 = arith.constant 1.000000e+00 : f32
    %59 = vector.broadcast %cst_32 : f32 to vector<2x128xf32>
    %60 = arith.addf %59, %58 : vector<2x128xf32>
    %61 = arith.divf %59, %60 : vector<2x128xf32>
    %62 = math.tanh %56 : vector<2x128xf32>
    %63 = vector.extract_strided_slice %61 {offsets = [0, 0], sizes = [2, 32], strides = [1, 1]} : vector<2x128xf32> to vector<2x32xf32>
    %64 = vector.extract_strided_slice %61 {offsets = [0, 32], sizes = [2, 32], strides = [1, 1]} : vector<2x128xf32> to vector<2x32xf32>
    %65 = vector.extract_strided_slice %61 {offsets = [0, 96], sizes = [2, 32], strides = [1, 1]} : vector<2x128xf32> to vector<2x32xf32>
    %66 = vector.extract_strided_slice %62 {offsets = [0, 64], sizes = [2, 32], strides = [1, 1]} : vector<2x128xf32> to vector<2x32xf32>
    %67 = arith.mulf %64, %45 : vector<2x32xf32>
    %68 = arith.mulf %63, %66 : vector<2x32xf32>
    %69 = arith.addf %67, %68 : vector<2x32xf32>
    %70 = math.tanh %69 : vector<2x32xf32>
    %71 = arith.mulf %65, %70 : vector<2x32xf32>
    %72 = tpu.concatenate %71, %69 in 1 : vector<2x32xf32>, vector<2x32xf32> -> vector<2x64xf32>
    %c1_33 = arith.constant 1 : index
    %c0_34 = arith.constant 0 : index
    %c0_35 = arith.constant 0 : index
    %73 = vector.load %arg8[%c1_33, %c0_34, %c0_35] : memref<2x2x64xf32, #tpu.memory_space<vmem>>, vector<1x2x64xf32>
    %74 = vector.shape_cast %73 : vector<1x2x64xf32> to vector<2x64xf32>
    %75 = vector.shape_cast %72 : vector<2x64xf32> to vector<1x2x64xf32>
    tpu.vector_store %arg8[%c1_33, %c0_34, %c0_35], %75 {strides = array<i32>} : memref<2x2x64xf32, #tpu.memory_space<vmem>>, vector<1x2x64xf32>,
    %c0_36 = arith.constant 0 : index
    %c0_37 = arith.constant 0 : index
    %c0_38 = arith.constant 0 : index
    %76 = vector.load %arg7[%c0_36, %c0_37, %c0_38] : memref<1x2x32xf32, #tpu.memory_space<vmem>>, vector<1x2x32xf32>
    %77 = vector.shape_cast %76 : vector<1x2x32xf32> to vector<2x32xf32>
    %78 = vector.shape_cast %71 : vector<2x32xf32> to vector<1x2x32xf32>
    tpu.vector_store %arg7[%c0_36, %c0_37, %c0_38], %78 {strides = array<i32>} : memref<1x2x32xf32, #tpu.memory_space<vmem>>, vector<1x2x32xf32>,
    return
  }
  func.func @transform_0(%arg0: i32) -> (i32, i32, i32) {
    %c0_i32 = arith.constant 0 : i32
    %c0_i32_0 = arith.constant 0 : i32
    %c0_i32_1 = arith.constant 0 : i32
    return %arg0, %c0_i32, %c0_i32_0 : i32, i32, i32
  }
  func.func @transform_1(%arg0: i32) -> (i32, i32, i32) {
    %c0_i32 = arith.constant 0 : i32
    %c0_i32_0 = arith.constant 0 : i32
    %c0_i32_1 = arith.constant 0 : i32
    %c0_i32_2 = arith.constant 0 : i32
    return %c0_i32, %c0_i32_0, %c0_i32_1 : i32, i32, i32
  }
  func.func @transform_2(%arg0: i32) -> (i32, i32) {
    %c0_i32 = arith.constant 0 : i32
    %c0_i32_0 = arith.constant 0 : i32
    %c0_i32_1 = arith.constant 0 : i32
    return %c0_i32, %c0_i32_0 : i32, i32
  }
  func.func @transform_3(%arg0: i32) -> (i32, i32, i32) {
    %c0_i32 = arith.constant 0 : i32
    %c0_i32_0 = arith.constant 0 : i32
    %c0_i32_1 = arith.constant 0 : i32
    %c0_i32_2 = arith.constant 0 : i32
    return %c0_i32, %c0_i32_0, %c0_i32_1 : i32, i32, i32
  }
  func.func @transform_4(%arg0: i32) -> (i32, i32, i32) {
    %c0_i32 = arith.constant 0 : i32
    %c0_i32_0 = arith.constant 0 : i32
    %c0_i32_1 = arith.constant 0 : i32
    %c0_i32_2 = arith.constant 0 : i32
    return %c0_i32, %c0_i32_0, %c0_i32_1 : i32, i32, i32
  }
  func.func @transform_5(%arg0: i32) -> (i32, i32, i32) {
    %c0_i32 = arith.constant 0 : i32
    %c0_i32_0 = arith.constant 0 : i32
    %c0_i32_1 = arith.constant 0 : i32
    %c0_i32_2 = arith.constant 0 : i32
    return %c0_i32, %c0_i32_0, %c0_i32_1 : i32, i32, i32
  }
  func.func @transform_6(%arg0: i32) -> (i32, i32, i32) {
    %c0_i32 = arith.constant 0 : i32
    %c0_i32_0 = arith.constant 0 : i32
    %c0_i32_1 = arith.constant 0 : i32
    return %arg0, %c0_i32, %c0_i32_0 : i32, i32, i32
  }
  func.func @transform_7(%arg0: i32) -> (i32, i32, i32) {
    %c0_i32 = arith.constant 0 : i32
    %c0_i32_0 = arith.constant 0 : i32
    %c0_i32_1 = arith.constant 0 : i32
    %c0_i32_2 = arith.constant 0 : i32
    return %c0_i32, %c0_i32_0, %c0_i32_1 : i32, i32, i32
  }
}

</mosaic_0001>

<llo_original>
// kernel: lstm_controller_rollout.1
$region0: #{lstm_controller_rollout.1}
  #allocation0 [shape = 'u32[]', space=smem, size = 0x4, offset = 0x4, fixed_abs, tag = 'smem constant byte address 0x4 - core index']
  #allocation1 [shape = 'u32[144,128]{1,0:T(1,128)}', space=vmem, size = 0x12000, scoped, tag = 'internal scratch']
  %s0 = inlined_call_operand.vmem [shape: f32[1,2,16], index: 0, kind: input, shape index: {}]
  %s1 = inlined_call_operand.vmem [shape: f32[2,2,64], index: 1, kind: input, shape index: {}, may-alias: {1,7}]
  %s2 = inlined_call_operand.vmem [shape: bf16[16,128], index: 2, kind: input, shape index: {}]
  %s3 = inlined_call_operand.vmem [shape: bf16[1,32,128], index: 3, kind: input, shape index: {}]
  %s4 = inlined_call_operand.hbm [shape: bf16[2,32,128], index: 4, kind: input, shape index: {}]
  %s5 = inlined_call_operand.vmem [shape: f32[2,1,128], index: 5, kind: input, shape index: {}]
  %s6 = inlined_call_operand.hbm [shape: f32[1,2,32], index: 6, kind: output, shape index: {0}]
  %s7 = inlined_call_operand.vmem [shape: f32[2,2,64], index: 7, kind: output, shape index: {1}, may-alias: {1,7}]
  %8 = xla_tuple %s6, %s7
  %s9 = sld [smem:[#allocation0]]
  $region50: #{lstm_controller_rollout.1} parent=0
    _
  %s11 = ssub.s32 1, %s9
  %s12 = scalar_select 0, %s11, %s9
  $region1: #{lstm_controller_rollout.1} parent=0
    #allocation2 [shape = 'u8[16384]{0}', space=vmem, size = 0x4000, scoped, tag = 'input window, operand 4, single buffered']
    #allocation3 [shape = 's32[1]{0}', space=sflag, size = 0x4, scoped, tag = 'scoped memory for lstm_controller_rollout.1']
    #allocation4 [shape = 's32[1]{0}', space=sflag, size = 0x4, scoped, tag = 'scoped memory for lstm_controller_rollout.1']
    #allocation5 [shape = 'u8[1024]{0}', space=vmem, size = 0x400, scoped, tag = 'output window, operand 0, single buffered']
    %13 = vsyncpa [#allocation3], 0
    %14 = vsyncpa [#allocation4], 0
    // Predicated region
    $region2: #{lstm_controller_rollout.1} parent=1 // pred_check
      _
    $region3: #{lstm_controller_rollout.1} parent=1 // pred_check_branch
      %16 = sbr.rel (0) target = $region5
    $region4: #{lstm_controller_rollout.1} parent=1 // pred_region
      _
    $region5: #{lstm_controller_rollout.1} parent=1 // pred_fallthru
      _
    // Predicated region
    $region6: #{lstm_controller_rollout.1} parent=1 // pred_check
      _
    $region7: #{lstm_controller_rollout.1} parent=1 // pred_check_branch
      %18 = sbr.rel (0) target = $region9
    $region8: #{lstm_controller_rollout.1} parent=1 // pred_region
      _
    $region9: #{lstm_controller_rollout.1} parent=1 // pred_fallthru
      _
    // Predicated region
    $region10: #{lstm_controller_rollout.1} parent=1 // pred_check
      _
    $region11: #{lstm_controller_rollout.1} parent=1 // pred_check_branch
      %20 = sbr.rel (0) target = $region13
    $region12: #{lstm_controller_rollout.1} parent=1 // pred_region
      _
    $region13: #{lstm_controller_rollout.1} parent=1 // pred_fallthru
      _
    // Predicated region
    $region14: #{lstm_controller_rollout.1} parent=1 // pred_check
      _
    $region15: #{lstm_controller_rollout.1} parent=1 // pred_check_branch
      %22 = sbr.rel (0) target = $region17
    $region16: #{lstm_controller_rollout.1} parent=1 // pred_region
      _
    $region17: #{lstm_controller_rollout.1} parent=1 // pred_fallthru
      _
    // Predicated region
    $region18: #{lstm_controller_rollout.1} parent=1 // pred_check
      _
    $region19: #{lstm_controller_rollout.1} parent=1 // pred_check_branch
      %24 = sbr.rel (0) target = $region21
    $region20: #{lstm_controller_rollout.1} parent=1 // pred_region
      %s26 = ssub.s32 512, 512
      %27 = vsyncadd [#allocation3], %s26
      %s28 = sshll.u32 [#allocation2], 4
      %s29 = int_to_ptr.vmem [resolvable:$true] %s28
      %34 = dma.hbm_to_vmem [thread:$0]  %s4, 512, %s29, [#allocation3], 64, 64, 4
    $region21: #{lstm_controller_rollout.1} parent=1 // pred_fallthru
      _
    // Predicated region
    $region22: #{lstm_controller_rollout.1} parent=1 // pred_check
      _
    $region23: #{lstm_controller_rollout.1} parent=1 // pred_check_branch
      %36 = sbr.rel (0) target = $region25
    $region24: #{lstm_controller_rollout.1} parent=1 // pred_region
      _
    $region25: #{lstm_controller_rollout.1} parent=1 // pred_fallthru
      _
    // Predicated region
    $region26: #{lstm_controller_rollout.1} parent=1 // pred_check
      _
    $region27: #{lstm_controller_rollout.1} parent=1 // pred_check_branch
      %38 = sbr.rel (0) target = $region29
    $region28: #{lstm_controller_rollout.1} parent=1 // pred_region
      %39 = dma.done [#allocation3], 512
    $region29: #{lstm_controller_rollout.1} parent=1 // pred_fallthru
      _
    %p41 = scmp.eq.s32.totalorder 0, 0
    // Predicated region
    $region30: #{lstm_controller_rollout.1} parent=1 // pred_check
      %p42 = pneg %p41
    $region31: #{lstm_controller_rollout.1} parent=1 // pred_check_branch
      %44 = sbr.rel (%p42) target = $region33
    $region32: #{lstm_controller_rollout.1} parent=1 // pred_region
      %v45 = vld [vmem:[%s1] sm:$0x3]
      %v46 = vld [vmem:[%s1 + $0x2] sm:$0x3]
      %vm47 = vcmask 517120
      %48 = vst.msk [vmem:[%s7] sm:$0x3] %vm47, %v45
      %49 = vst.msk [vmem:[%s7 + $0x2] sm:$0x3] %vm47, %v46
    $region33: #{lstm_controller_rollout.1} parent=1 // pred_fallthru
      _
    %v50 = vld [vmem:[%s0] sm:$0x3]
    %v51 = vld [vmem:[%s2] sm:$0xf]
    %v52 = vld [vmem:[%s2 + $0x4] sm:$0xf]
    %v53 = vld [vmem:[%s7] sm:$0x3]
    %v54 = vpack.c.bf16 %v50, %v50
    %v55 = vpack.c.bf16 %v53, %v53
    %v56 = vld [vmem:[#allocation2] sm:$0xf]
    %v57 = vld [vmem:[#allocation2 + $0x4] sm:$0xf]
    %v58 = vld [vmem:[#allocation2 + $0x8] sm:$0xf]
    %v59 = vld [vmem:[#allocation2 + $0xc] sm:$0xf]
    %v64 = vunpack.c.l.b16 %v56
    %v65 = vunpack.c.l.b16 %v57
    %v66 = vunpack.c.l.b16 %v58
    %v67 = vunpack.c.l.b16 %v59
    %v68 = vpack.c.b16 %v65, %v64
    %v69 = vpack.c.b16 %v67, %v66
    %vm72 = vcmask 261120
    %v74 = vsel %vm72, %v55, 0
    %76 = vmatprep.subr.bf16.mxu0 0
    %77 = vmatpush1.bf16.msra.mxu0 0
    %78 = vmatprep.subr.bf16.mxu0 0
    %79 = vmatpush1.bf16.msra.mxu0 0
    %80 = vmatprep.subr.bf16.mxu0 0
    %81 = vmatpush1.bf16.msra.mxu0 0
    %82 = vmatprep.subr.bf16.mxu0 0
    %83 = vmatpush1.bf16.msra.mxu0 0
    %84 = vmatprep.subr.bf16.mxu0 0
    %85 = vmatpush1.bf16.msra.mxu0 0
    %86 = vmatprep.subr.bf16.mxu0 0
    %87 = vmatpush1.bf16.msra.mxu0 0
    %88 = vmatprep.subr.bf16.mxu0 0
    %89 = vmatpush1.bf16.msra.mxu0 %v69
    %90 = vmatprep.subr.bf16.mxu0 0
    %91 = vmatpush1.bf16.msra.mxu0 %v68
    %92 = vmatprep.subr.bf16.mxu0 0
    %93 = vmatpush2.bf16.msra.mxu0 0
    %94 = vmatprep.subr.bf16.mxu0 0
    %95 = vmatpush2.bf16.msra.mxu0 0
    %96 = vmatprep.subr.bf16.mxu0 0
    %97 = vmatpush2.bf16.msra.mxu0 0
    %98 = vmatprep.subr.bf16.mxu0 0
    %99 = vmatpush2.bf16.msra.mxu0 0
    %100 = vmatprep.subr.bf16.mxu0 0
    %101 = vmatpush2.bf16.msra.mxu0 0
    %102 = vmatprep.subr.bf16.mxu0 0
    %103 = vmatpush2.bf16.msra.mxu0 0
    %104 = vmatprep.subr.bf16.mxu0 0
    %105 = vmatpush2.bf16.msra.mxu0 0
    %106 = vmatprep.subr.bf16.mxu0 0
    %107 = vmatpush2.bf16.msra.mxu0 0
    %108 = vmatprep.mubr.bf16.mxu0 0
    %109 = vmatmul.mubr.bf16.gmra.mxu0 %v74
    %v110 = vpop.f32.mrf.mxu0
    %v111 = vadd.f32 0.0, %v110
    %v112 = vpop.f32.mrf.mxu0
    %v113 = vpop.f32.mrf.mxu0
    %v114 = vpop.f32.mrf.mxu0
    %115 = vdwg.mxu0
    %v118 = vunpack.c.l.b16 %v51
    %v119 = vunpack.c.l.b16 %v52
    %v120 = vpack.c.b16 %v119, %v118
    %vm122 = vcmask 130048
    %v124 = vsel %vm122, %v54, 0
    %126 = vmatprep.subr.bf16.mxu0 0
    %127 = vmatpush1.bf16.msra.mxu0 0
    %128 = vmatprep.subr.bf16.mxu0 0
    %129 = vmatpush1.bf16.msra.mxu0 0
    %130 = vmatprep.subr.bf16.mxu0 0
    %131 = vmatpush1.bf16.msra.mxu0 0
    %132 = vmatprep.subr.bf16.mxu0 0
    %133 = vmatpush1.bf16.msra.mxu0 0
    %134 = vmatprep.subr.bf16.mxu0 0
    %135 = vmatpush1.bf16.msra.mxu0 0
    %136 = vmatprep.subr.bf16.mxu0 0
    %137 = vmatpush1.bf16.msra.mxu0 0
    %138 = vmatprep.subr.bf16.mxu0 0
    %139 = vmatpush1.bf16.msra.mxu0 0
    %140 = vmatprep.subr.bf16.mxu0 0
    %141 = vmatpush1.bf16.msra.mxu0 %v120
    %142 = vmatprep.subr.bf16.mxu0 0
    %143 = vmatpush2.bf16.msra.mxu0 0
    %144 = vmatprep.subr.bf16.mxu0 0
    %145 = vmatpush2.bf16.msra.mxu0 0
    %146 = vmatprep.subr.bf16.mxu0 0
    %147 = vmatpush2.bf16.msra.mxu0 0
    %148 = vmatprep.subr.bf16.mxu0 0
    %149 = vmatpush2.bf16.msra.mxu0 0
    %150 = vmatprep.subr.bf16.mxu0 0
    %151 = vmatpush2.bf16.msra.mxu0 0
    %152 = vmatprep.subr.bf16.mxu0 0
    %153 = vmatpush2.bf16.msra.mxu0 0
    %154 = vmatprep.subr.bf16.mxu0 0
    %155 = vmatpush2.bf16.msra.mxu0 0
    %156 = vmatprep.subr.bf16.mxu0 0
    %157 = vmatpush2.bf16.msra.mxu0 0
    %158 = vmatprep.mubr.bf16.mxu0 0
    %159 = vmatmul.mubr.bf16.gmra.mxu0 %v124
    %v160 = vpop.f32.mrf.mxu0
    %v161 = vadd.f32 %v111, %v160
    %v162 = vpop.f32.mrf.mxu0
    %v163 = vpop.f32.mrf.mxu0
    %v164 = vpop.f32.mrf.mxu0
    %165 = vdwg.mxu0
    %v166 = vld [vmem:[%s5] sm:$0x1]
    %v168 = vlaneseq
    %v169 = vshrl.u32 %v168, 7
    %v170 = vsub.s32 0, %v169
    %v171 = vrot.slane %v166, %v170
    %v173 = vadd.f32 %v161, %v171
    %v174 = vxor.u32 %v173, 2147483648
    %v175 = vmul.f32 %v174, 1.442695
    %v176 = vpow.pop %v175
    %v177 = vadd.f32 %v176, 1.0
    %v178 = vrcp.pop %v177
    %v179 = vmul.f32 1.0, %v178
    %v180 = vtanh.pop %v173
    %v181 = vmul.f32 %v179, %v53
    %183 = vrot.lane.b32.xlu0 %v180, 64
    %v184 = vpop.permute.xlu0 %183
    %v186 = vmul.f32 %v179, %v184
    %188 = vrot.lane.b32.xlu0 %v186, 32
    %v189 = vpop.permute.xlu0 %188
    %v191 = vadd.f32 %v181, %v189
    %v192 = vtanh.pop %v191
    %194 = vrot.lane.b32.xlu0 %v192, 64
    %v195 = vpop.permute.xlu0 %194
    %v197 = vmul.f32 %v179, %v195
    %199 = vrot.lane.b32.xlu0 %v197, 32
    %v200 = vpop.permute.xlu0 %199
    %v202 = vsel %vm72, %v200, %v191
    %vm203 = vcmask 517120
    %204 = vst.msk [vmem:[%s7] sm:$0x3] %vm203, %v202
    %v205 = vld [vmem:[%s3] sm:$0xf]
    %v206 = vld [vmem:[%s3 + $0x4] sm:$0xf]
    %v207 = vld [vmem:[%s3 + $0x8] sm:$0xf]
    %v208 = vld [vmem:[%s3 + $0xc] sm:$0xf]
    %s209 = scalar_lea.vmem %s7, 2
    %v210 = vld [vmem:[%s209] sm:$0x3]
    %v211 = vpack.c.bf16 %v197, %v197
    %v212 = vpack.c.bf16 %v210, %v210
    %s213 = scalar_lea.vmem [#allocation2], 16
    %v214 = vld [vmem:[%s213] sm:$0xf]
    %v215 = vld [vmem:[%s213 + $0x4] sm:$0xf]
    %v216 = vld [vmem:[%s213 + $0x8] sm:$0xf]
    %v217 = vld [vmem:[%s213 + $0xc] sm:$0xf]
    %v222 = vunpack.c.l.b16 %v214
    %v223 = vunpack.c.l.b16 %v215
    %v224 = vunpack.c.l.b16 %v216
    %v225 = vunpack.c.l.b16 %v217
    %v226 = vpack.c.b16 %v223, %v222
    %v227 = vpack.c.b16 %v225, %v224
    %v231 = vsel %vm72, %v212, 0
    %233 = vmatprep.subr.bf16.mxu0 0
    %234 = vmatpush1.bf16.msra.mxu0 0
    %235 = vmatprep.subr.bf16.mxu0 0
    %236 = vmatpush1.bf16.msra.mxu0 0
    %237 = vmatprep.subr.bf16.mxu0 0
    %238 = vmatpush1.bf16.msra.mxu0 0
    %239 = vmatprep.subr.bf16.mxu0 0
    %240 = vmatpush1.bf16.msra.mxu0 0
    %241 = vmatprep.subr.bf16.mxu0 0
    %242 = vmatpush1.bf16.msra.mxu0 0
    %243 = vmatprep.subr.bf16.mxu0 0
    %244 = vmatpush1.bf16.msra.mxu0 0
    %245 = vmatprep.subr.bf16.mxu0 0
    %246 = vmatpush1.bf16.msra.mxu0 %v227
    %247 = vmatprep.subr.bf16.mxu0 0
    %248 = vmatpush1.bf16.msra.mxu0 %v226
    %249 = vmatprep.subr.bf16.mxu0 0
    %250 = vmatpush2.bf16.msra.mxu0 0
    %251 = vmatprep.subr.bf16.mxu0 0
    %252 = vmatpush2.bf16.msra.mxu0 0
    %253 = vmatprep.subr.bf16.mxu0 0
    %254 = vmatpush2.bf16.msra.mxu0 0
    %255 = vmatprep.subr.bf16.mxu0 0
    %256 = vmatpush2.bf16.msra.mxu0 0
    %257 = vmatprep.subr.bf16.mxu0 0
    %258 = vmatpush2.bf16.msra.mxu0 0
    %259 = vmatprep.subr.bf16.mxu0 0
    %260 = vmatpush2.bf16.msra.mxu0 0
    %261 = vmatprep.subr.bf16.mxu0 0
    %262 = vmatpush2.bf16.msra.mxu0 0
    %263 = vmatprep.subr.bf16.mxu0 0
    %264 = vmatpush2.bf16.msra.mxu0 0
    %265 = vmatprep.mubr.bf16.mxu0 0
    %266 = vmatmul.mubr.bf16.gmra.mxu0 %v231
    %v267 = vpop.f32.mrf.mxu0
    %v268 = vadd.f32 0.0, %v267
    %v269 = vpop.f32.mrf.mxu0
    %v270 = vpop.f32.mrf.mxu0
    %v271 = vpop.f32.mrf.mxu0
    %272 = vdwg.mxu0
    %274 = vrot.lane.b32.xlu0 %v211, 32
    %v275 = vpop.permute.xlu0 %274
    %v280 = vunpack.c.l.b16 %v205
    %v281 = vunpack.c.l.b16 %v206
    %v282 = vunpack.c.l.b16 %v207
    %v283 = vunpack.c.l.b16 %v208
    %v284 = vpack.c.b16 %v281, %v280
    %v285 = vpack.c.b16 %v283, %v282
    %v289 = vsel %vm72, %v275, 0
    %291 = vmatprep.subr.bf16.mxu0 0
    %292 = vmatpush1.bf16.msra.mxu0 0
    %293 = vmatprep.subr.bf16.mxu0 0
    %294 = vmatpush1.bf16.msra.mxu0 0
    %295 = vmatprep.subr.bf16.mxu0 0
    %296 = vmatpush1.bf16.msra.mxu0 0
    %297 = vmatprep.subr.bf16.mxu0 0
    %298 = vmatpush1.bf16.msra.mxu0 0
    %299 = vmatprep.subr.bf16.mxu0 0
    %300 = vmatpush1.bf16.msra.mxu0 0
    %301 = vmatprep.subr.bf16.mxu0 0
    %302 = vmatpush1.bf16.msra.mxu0 0
    %303 = vmatprep.subr.bf16.mxu0 0
    %304 = vmatpush1.bf16.msra.mxu0 %v285
    %305 = vmatprep.subr.bf16.mxu0 0
    %306 = vmatpush1.bf16.msra.mxu0 %v284
    %307 = vmatprep.subr.bf16.mxu0 0
    %308 = vmatpush2.bf16.msra.mxu0 0
    %309 = vmatprep.subr.bf16.mxu0 0
    %310 = vmatpush2.bf16.msra.mxu0 0
    %311 = vmatprep.subr.bf16.mxu0 0
    %312 = vmatpush2.bf16.msra.mxu0 0
    %313 = vmatprep.subr.bf16.mxu0 0
    %314 = vmatpush2.bf16.msra.mxu0 0
    %315 = vmatprep.subr.bf16.mxu0 0
    %316 = vmatpush2.bf16.msra.mxu0 0
    %317 = vmatprep.subr.bf16.mxu0 0
    %318 = vmatpush2.bf16.msra.mxu0 0
    %319 = vmatprep.subr.bf16.mxu0 0
    %320 = vmatpush2.bf16.msra.mxu0 0
    %321 = vmatprep.subr.bf16.mxu0 0
    %322 = vmatpush2.bf16.msra.mxu0 0
    %323 = vmatprep.mubr.bf16.mxu0 0
    %324 = vmatmul.mubr.bf16.gmra.mxu0 %v289
    %v325 = vpop.f32.mrf.mxu0
    %v326 = vadd.f32 %v268, %v325
    %v327 = vpop.f32.mrf.mxu0
    %v328 = vpop.f32.mrf.mxu0
    %v329 = vpop.f32.mrf.mxu0
    %330 = vdwg.mxu0
    %s331 = scalar_lea.vmem %s5, 1
    %v332 = vld [vmem:[%s331] sm:$0x1]
    %v334 = vlaneseq
    %v335 = vshrl.u32 %v334, 7
    %v336 = vsub.s32 0, %v335
    %v337 = vrot.slane %v332, %v336
    %v339 = vadd.f32 %v326, %v337
    %v340 = vxor.u32 %v339, 2147483648
    %v341 = vmul.f32 %v340, 1.442695
    %v342 = vpow.pop %v341
    %v343 = vadd.f32 %v342, 1.0
    %v344 = vrcp.pop %v343
    %v345 = vmul.f32 1.0, %v344
    %v346 = vtanh.pop %v339
    %v347 = vmul.f32 %v345, %v210
    %349 = vrot.lane.b32.xlu0 %v346, 64
    %v350 = vpop.permute.xlu0 %349
    %v352 = vmul.f32 %v345, %v350
    %354 = vrot.lane.b32.xlu0 %v352, 32
    %v355 = vpop.permute.xlu0 %354
    %v357 = vadd.f32 %v347, %v355
    %v358 = vtanh.pop %v357
    %360 = vrot.lane.b32.xlu0 %v358, 64
    %v361 = vpop.permute.xlu0 %360
    %v363 = vmul.f32 %v345, %v361
    %365 = vrot.lane.b32.xlu0 %v363, 32
    %v366 = vpop.permute.xlu0 %365
    %v368 = vsel %vm72, %v366, %v357
    %369 = vst.msk [vmem:[%s209] sm:$0x3] %vm203, %v368
    %vm370 = vcmask 254976
    %371 = vst.msk [vmem:[#allocation5] sm:$0x3] %vm370, %v366
    // Predicated region
    $region34: #{lstm_controller_rollout.1} parent=1 // pred_check
      _
    $region35: #{lstm_controller_rollout.1} parent=1 // pred_check_branch
      %373 = sbr.rel (0) target = $region37
    $region36: #{lstm_controller_rollout.1} parent=1 // pred_region
      %s375 = ssub.s32 32, 32
      %376 = vsyncadd [#allocation4], %s375
      %s378 = sshll.u32 [#allocation5], 4
      %s379 = int_to_ptr.vmem [resolvable:$true] %s378
      %381 = dma.vmem_to_hbm [thread:$0]  %s379, 32, %s6, [#allocation4]
    $region37: #{lstm_controller_rollout.1} parent=1 // pred_fallthru
      _
    // Predicated region
    $region38: #{lstm_controller_rollout.1} parent=1 // pred_check
      _
    $region39: #{lstm_controller_rollout.1} parent=1 // pred_check_branch
      %383 = sbr.rel (0) target = $region41
    $region40: #{lstm_controller_rollout.1} parent=1 // pred_region
      _
    $region41: #{lstm_controller_rollout.1} parent=1 // pred_fallthru
      _
    // Predicated region
    $region42: #{lstm_controller_rollout.1} parent=1 // pred_check
      _
    $region43: #{lstm_controller_rollout.1} parent=1 // pred_check_branch
      %385 = sbr.rel (0) target = $region45
    $region44: #{lstm_controller_rollout.1} parent=1 // pred_region
      %386 = dma.done [#allocation4], 32
    $region45: #{lstm_controller_rollout.1} parent=1 // pred_fallthru
      _
    // Predicated region
    $region46: #{lstm_controller_rollout.1} parent=1 // pred_check
      _
    $region47: #{lstm_controller_rollout.1} parent=1 // pred_check_branch
      %388 = sbr.rel (0) target = $region49
    $region48: #{lstm_controller_rollout.1} parent=1 // pred_region
      _
    $region49: #{lstm_controller_rollout.1} parent=1 // pred_fallthru
      _
    %389 = vsyncpa [#allocation3], 1
    %390 = vsyncpa [#allocation4], 1

</llo_original>
